<compile_context>
chip_gen: v7x
topology: tpu7x:2x2x1
jax: 0.10.0
libtpu: 0.0.40
codegen_flags: <defaults>
</compile_context>

<pallas_src>
import functools

import jax
import jax.numpy as jnp
from jax.experimental import pallas as pl
from jax.experimental.pallas import tpu as pltpu


def _nonlocal_kernel(a_ref, b_ref, g_ref, ww_ref, bw_ref,
                     o_ref, ssum_ref, ssq_ref, yacc_ref, *, mxu_dtype):
    j = pl.program_id(2)

    @pl.when(j == 0)
    def _init():
        yacc_ref[...] = jnp.zeros_like(yacc_ref)

    a_row = a_ref[0]                     # (1, T_i)  folded theta proj (query tile, lane-dense)
    b_col = b_ref[0]                     # (T_j, 1)  folded phi proj (key tile, sublane column)
    g_j = g_ref[0]                       # (Cip, T_j) g 1x1-conv of the key tile (precomputed)

    # Affinity tile, built already transposed: f_t[j, i] = relu(b[j] + a[i]).
    # The 1/N scale and all theta/phi/concat_project biases are folded into a/b.
    f_t = jnp.maximum(b_col + a_row, 0.0)                                      # (T_j, T_i)

    # y^T[c, i] += sum_j g[c, j] * f_t[j, i]  -- MXU-native, no transposed operand.
    yacc_ref[...] += jnp.dot(g_j.astype(mxu_dtype), f_t.astype(mxu_dtype),
                             preferred_element_type=jnp.float32)               # (Cip, T_i)

    @pl.when(j == pl.num_programs(2) - 1)
    def _finalize():
        # W 1x1 conv (inter -> in channels); BN + residual are applied outside,
        # but per-channel statistic partials are emitted here so the conv output
        # is not re-read from HBM to compute the batch statistics.
        out_blk = jnp.dot(ww_ref[...], yacc_ref[...],
                          preferred_element_type=jnp.float32) + bw_ref[...]    # (C, T_i)
        o_ref[0] = out_blk
        ssum_ref[0, 0] = jnp.sum(out_blk, axis=1, keepdims=True)               # (C, 1)
        ssq_ref[0, 0] = jnp.sum(out_blk * out_blk, axis=1, keepdims=True)      # (C, 1)


def _device_tuning():
    """(tile_cap, vmem_limit_bytes) per TPU generation.

    v5e/v6e: 128 MiB physical VMEM -> bigger tiles + raised scoped limit.
    v7x / unknown: 64 MiB per core -> stay conservative; B and i stay
    "parallel" so both TensorCores of the megacore get work.
    """
    try:
        kind = jax.devices()[0].device_kind.lower()
    except Exception:
        kind = ""
    if "v5" in kind or "v6" in kind:
        return 1024, 96 * 1024 * 1024
    return 512, 40 * 1024 * 1024


def _pick_tile(hw, tile_cap):
    if hw % 128 == 0:
        t = max(128, (min(tile_cap, hw) // 128) * 128)
        while hw % t != 0:
            t -= 128
        return t
    # TODO(synk): HW not divisible by 128 falls back to one full-extent spatial
    # tile (exact, but VMEM-bound for very large odd HW); a masked last tile
    # would be needed to tile such sizes.
    return hw


def nonlocal_block(x_nchw, params, *, tile=None, vmem_limit_bytes=None, mxu_bf16=False):
    """Forward pass of _NonLocalBlock. x_nchw: (B, C, H, W) float32, NCHW."""
    B, C, H, W = x_nchw.shape
    HW = H * W
    Ci = params["wg"].shape[0]
    f32 = jnp.float32

    tile_cap, vmem_default = _device_tuning()
    if tile is None:
        tile = tile_cap
    if vmem_limit_bytes is None:
        vmem_limit_bytes = vmem_default

    # Channel-major view: NCHW flattened over space is already (B, C, HW).
    x_cm = x_nchw.reshape(B, C, HW).astype(f32)

    T = _pick_tile(HW, tile)
    nI = HW // T
    nJ = HW // T

    # ---- Fold concat_project and the 1/N scale into the theta/phi projections ----
    wct = params["wcp"][:Ci]                       # theta half of concat_project weight
    wcph = params["wcp"][Ci:]                      # phi half
    inv_n = 1.0 / HW
    w_a = (params["wtheta"].T @ wct) * inv_n       # (C,)  theta side
    w_b = (params["wphi"].T @ wcph) * inv_n        # (C,)  phi side
    bias_ab = (jnp.dot(params["btheta"], wct) + jnp.dot(params["bphi"], wcph)) * inv_n

    # ---- Hoisted key/query-side projections: ONE stacked einsum, x read once ----
    Cip = max(8, ((Ci + 7) // 8) * 8)              # pad inter_channels to 8 sublanes (zero rows inert)
    # NOTE: for real non-local shapes keep Ci >= 128 (>=256 on v6e/v7x) or the
    # [Cip,T]x[T,T] dot uses only a sliver of the MXU rows.
    w_stack = jnp.zeros((Cip + 2, C), f32)
    w_stack = w_stack.at[:Ci].set(params["wg"].astype(f32))
    w_stack = w_stack.at[Cip].set(w_b.astype(f32))
    w_stack = w_stack.at[Cip + 1].set(w_a.astype(f32))
    b_stack = jnp.zeros((Cip + 2,), f32)
    b_stack = b_stack.at[:Ci].set(params["bg"].astype(f32))
    b_stack = b_stack.at[Cip + 1].set(jnp.asarray(bias_ab, f32))   # scalar bias on the a side
    proj = jnp.einsum("oc,bcn->bon", w_stack, x_cm) + b_stack[None, :, None]   # (B, Cip+2, HW)
    g_cm = proj[:, :Cip]                                           # (B, Cip, HW) lane-dense
    b_col = proj[:, Cip].reshape(B, HW, 1)                         # phi side -> sublane column (key)
    a_row = proj[:, Cip + 1].reshape(B, 1, HW)                     # theta side -> lane-dense row (query)

    ww_p = jnp.zeros((C, Cip), f32).at[:, :Ci].set(params["wW"].astype(f32))
    bw_p = params["bW"].reshape(C, 1).astype(f32)

    mxu_dtype = jnp.bfloat16 if mxu_bf16 else f32
    kernel = functools.partial(_nonlocal_kernel, mxu_dtype=mxu_dtype)

    conv_cm, ssum, ssq = pl.pallas_call(
        kernel,
        out_shape=(
            jax.ShapeDtypeStruct((B, C, HW), f32),        # W(y), channel-major
            jax.ShapeDtypeStruct((B, nI, C, 1), f32),     # per-tile channel sums
            jax.ShapeDtypeStruct((B, nI, C, 1), f32),     # per-tile channel sum-of-squares
        ),
        grid_spec=pltpu.PrefetchScalarGridSpec(
            num_scalar_prefetch=0,
            grid=(B, nI, nJ),
            in_specs=[
                pl.BlockSpec((1, 1, T), lambda b, i, j: (b, 0, i)),     # a row (query tile)
                pl.BlockSpec((1, T, 1), lambda b, i, j: (b, j, 0)),     # b column (key tile)
                pl.BlockSpec((1, Cip, T), lambda b, i, j: (b, 0, j)),   # g key tile (precomputed)
                pl.BlockSpec((C, Cip), lambda b, i, j: (0, 0)),         # W conv weight (padded)
                pl.BlockSpec((C, 1), lambda b, i, j: (0, 0)),           # W conv bias
            ],
            out_specs=(
                pl.BlockSpec((1, C, T), lambda b, i, j: (b, 0, i)),
                pl.BlockSpec((1, 1, C, 1), lambda b, i, j: (b, i, 0, 0)),
                pl.BlockSpec((1, 1, C, 1), lambda b, i, j: (b, i, 0, 0)),
            ),
            scratch_shapes=[pltpu.VMEM((Cip, T), f32)],   # y^T accumulator
        ),
        compiler_params=pltpu.CompilerParams(
            dimension_semantics=("parallel", "parallel", "arbitrary"),
            vmem_limit_bytes=vmem_limit_bytes,
        ),
    )(a_row, b_col, g_cm, ww_p, bw_p)

    # BatchNorm2d (training-mode batch stats, biased var, eps=1e-5) from the fused
    # partial sums, then affine + residual -- one lightweight elementwise pass.
    n_tot = float(B * HW)
    mean = jnp.sum(ssum, axis=(0, 1, 3)) / n_tot                          # (C,)
    var = jnp.maximum(jnp.sum(ssq, axis=(0, 1, 3)) / n_tot - mean * mean, 0.0)
    scale = params["bn_gamma"] * jax.lax.rsqrt(var + 1e-5)
    shift = params["bn_beta"] - mean * scale
    z_cm = conv_cm * scale[None, :, None] + shift[None, :, None] + x_cm
    return z_cm.reshape(B, C, H, W)                                       # back to NCHW (pure reshape)


def reference(x_nchw, params):
    """Pure-JAX reference following the PyTorch forward literally."""
    B, C, H, W = x_nchw.shape
    HW = H * W
    Ci = params["wg"].shape[0]
    xf = x_nchw.reshape(B, C, HW)
    g = jnp.einsum("oc,bcn->bon", params["wg"], xf) + params["bg"][:, None]
    theta = jnp.einsum("oc,bcn->bon", params["wtheta"], xf) + params["btheta"][:, None]
    phi = jnp.einsum("oc,bcn->bon", params["wphi"], xf) + params["bphi"][:, None]
    g_x = jnp.transpose(g, (0, 2, 1))                                  # (B, HW, Ci)
    th = jnp.broadcast_to(theta[:, :, :, None], (B, Ci, HW, HW))
    ph = jnp.broadcast_to(phi[:, :, None, :], (B, Ci, HW, HW))
    cat = jnp.concatenate([th, ph], axis=1)                            # (B, 2Ci, HW, HW)
    f = jnp.einsum("c,bcij->bij", params["wcp"], cat)
    f = jax.nn.relu(f) / HW
    y = jnp.einsum("bij,bjc->bic", f, g_x)                             # (B, HW, Ci)
    y = jnp.transpose(y, (0, 2, 1))                                    # (B, Ci, HW)
    wy = jnp.einsum("oc,bcn->bon", params["wW"], y) + params["bW"][:, None]
    mean = wy.mean(axis=(0, 2))
    var = wy.var(axis=(0, 2))
    wy = ((wy - mean[:, None]) * jax.lax.rsqrt(var[:, None] + 1e-5)
          * params["bn_gamma"][:, None] + params["bn_beta"][:, None])
    return wy.reshape(B, C, H, W) + x_nchw


def make_params(key, in_channels, inter_channels):
    C, Ci = in_channels, inter_channels
    ks = jax.random.split(key, 12)

    def kaiming(k, shape, fan_in):
        return jax.random.normal(k, shape, jnp.float32) * jnp.sqrt(2.0 / fan_in)

    # NOTE: PyTorch init sets biases and BN affine params to 0 (degenerate, output==x);
    # we use small deterministic random values instead so the kernel path is exercised.
    return {
        "wg": kaiming(ks[0], (Ci, C), C),
        "bg": 0.1 * jax.random.normal(ks[1], (Ci,), jnp.float32),
        "wtheta": kaiming(ks[2], (Ci, C), C),
        "btheta": 0.1 * jax.random.normal(ks[3], (Ci,), jnp.float32),
        "wphi": kaiming(ks[4], (Ci, C), C),
        "bphi": 0.1 * jax.random.normal(ks[5], (Ci,), jnp.float32),
        "wcp": kaiming(ks[6], (2 * Ci,), 2 * Ci),         # concat_project, no bias
        "wW": kaiming(ks[7], (C, Ci), Ci),
        "bW": 0.1 * jax.random.normal(ks[8], (C,), jnp.float32),
        "bn_gamma": 1.0 + 0.1 * jax.random.normal(ks[9], (C,), jnp.float32),
        "bn_beta": 0.1 * jax.random.normal(ks[10], (C,), jnp.float32),
    }


if __name__ == "__main__":
    # TODO(synk): the sub_sample > 1 max-pool branch of the module is not
    # implemented (module under test uses sub_sample=1).
    B, C, H, W = 2, 4, 16, 16
    Ci = C // 2  # inter_channels default

    key = jax.random.PRNGKey(0)
    kx, kp = jax.random.split(key)
    x = jax.random.normal(kx, (B, C, H, W), jnp.float32)
    params = make_params(kp, C, Ci)

    z = jax.block_until_ready(nonlocal_block(x, params))
    z_ref = jax.block_until_ready(reference(x, params))

    assert z.shape == (B, C, H, W)
    assert jnp.allclose(z, z_ref, rtol=1e-4, atol=1e-4), "mismatch vs JAX reference"
    print("KERNEL_OK")
</pallas_src>

<mosaic_0001>
module attributes {stable_mosaic.version = 11 : i64} {
  func.func @_nonlocal_kernel(%arg0: i32, %arg1: i32, %arg2: i32, %arg3: memref<1x1x256xf32, #tpu.memory_space<vmem>>, %arg4: memref<1x256x1xf32, #tpu.memory_space<vmem>>, %arg5: memref<1x8x256xf32, #tpu.memory_space<vmem>>, %arg6: memref<4x8xf32, #tpu.memory_space<vmem>>, %arg7: memref<4x1xf32, #tpu.memory_space<vmem>>, %arg8: memref<1x4x256xf32, #tpu.memory_space<vmem>>, %arg9: memref<1x1x4x1xf32, #tpu.memory_space<vmem>>, %arg10: memref<1x1x4x1xf32, #tpu.memory_space<vmem>>, %arg11: memref<8x256xf32, #tpu.memory_space<vmem>>) attributes {dimension_semantics = [#tpu.dimension_semantics<parallel>, #tpu.dimension_semantics<parallel>, #tpu.dimension_semantics<arbitrary>], iteration_bounds = array<i64: 2, 1, 1>, scalar_prefetch = 0 : i64, scratch_operands = 1 : i64, tpu.core_type = #tpu.core_type<tc>, window_params = [{transform_indices = @transform_0, window_bounds = array<i64: 1, 1, 256>}, {transform_indices = @transform_1, window_bounds = array<i64: 1, 256, 1>}, {transform_indices = @transform_2, window_bounds = array<i64: 1, 8, 256>}, {pipeline_mode = #tpu.pipeline_mode<synchronous>, transform_indices = @transform_3, window_bounds = array<i64: 4, 8>}, {pipeline_mode = #tpu.pipeline_mode<synchronous>, transform_indices = @transform_4, window_bounds = array<i64: 4, 1>}, {transform_indices = @transform_5, window_bounds = array<i64: 1, 4, 256>}, {transform_indices = @transform_6, window_bounds = array<i64: 1, 1, 4, 1>}, {transform_indices = @transform_7, window_bounds = array<i64: 1, 1, 4, 1>}]} {
    %c0_i32 = arith.constant 0 : i32
    %0 = arith.cmpi eq, %arg2, %c0_i32 : i32
    %1 = arith.extui %0 : i1 to i32
    %c0_i32_0 = arith.constant 0 : i32
    %2 = arith.cmpi ne, %1, %c0_i32_0 : i32
    scf.if %2 {
      %cst_16 = arith.constant 0.000000e+00 : f32
      %21 = vector.broadcast %cst_16 : f32 to vector<8x256xf32>
      %c0_17 = arith.constant 0 : index
      %c0_18 = arith.constant 0 : index
      %22 = vector.load %arg11[%c0_17, %c0_18] : memref<8x256xf32, #tpu.memory_space<vmem>>, vector<8x256xf32>
      tpu.vector_store %arg11[%c0_17, %c0_18], %21 {strides = array<i32>} : memref<8x256xf32, #tpu.memory_space<vmem>>, vector<8x256xf32>,
    } else {
    }
    %c0 = arith.constant 0 : index
    %c0_1 = arith.constant 0 : index
    %c0_2 = arith.constant 0 : index
    %3 = vector.load %arg3[%c0, %c0_1, %c0_2] : memref<1x1x256xf32, #tpu.memory_space<vmem>>, vector<1x1x256xf32>
    %4 = vector.shape_cast %3 : vector<1x1x256xf32> to vector<1x256xf32>
    %c0_3 = arith.constant 0 : index
    %c0_4 = arith.constant 0 : index
    %c0_5 = arith.constant 0 : index
    %5 = vector.load %arg4[%c0_3, %c0_4, %c0_5] : memref<1x256x1xf32, #tpu.memory_space<vmem>>, vector<1x256x1xf32>
    %6 = vector.shape_cast %5 : vector<1x256x1xf32> to vector<256x1xf32>
    %c0_6 = arith.constant 0 : index
    %c0_7 = arith.constant 0 : index
    %c0_8 = arith.constant 0 : index
    %7 = vector.load %arg5[%c0_6, %c0_7, %c0_8] : memref<1x8x256xf32, #tpu.memory_space<vmem>>, vector<1x8x256xf32>
    %8 = vector.shape_cast %7 : vector<1x8x256xf32> to vector<8x256xf32>
    %9 = vector.broadcast %6 : vector<256x1xf32> to vector<256x256xf32>
    %10 = vector.broadcast %4 : vector<1x256xf32> to vector<256x256xf32>
    %11 = arith.addf %9, %10 : vector<256x256xf32>
    %cst = arith.constant 0.000000e+00 : f32
    %12 = vector.broadcast %cst : f32 to vector<256x256xf32>
    %13 = arith.maximumf %11, %12 : vector<256x256xf32>
    %c0_9 = arith.constant 0 : index
    %c0_10 = arith.constant 0 : index
    %14 = vector.load %arg11[%c0_9, %c0_10] : memref<8x256xf32, #tpu.memory_space<vmem>>, vector<8x256xf32>
    %cst_11 = arith.constant dense<0.000000e+00> : vector<8x256xf32>
    %15 = tpu.matmul %8, %13, %cst_11 {dimension_numbers = #tpu.dot_dimension_numbers<[1], [0], [0], [1], [0, 0, 1, 1], [], []>} : vector<8x256xf32>, vector<256x256xf32>, vector<8x256xf32> -> vector<8x256xf32>
    %16 = arith.addf %14, %15 : vector<8x256xf32>
    %c0_12 = arith.constant 0 : index
    %c0_13 = arith.constant 0 : index
    %17 = vector.load %arg11[%c0_12, %c0_13] : memref<8x256xf32, #tpu.memory_space<vmem>>, vector<8x256xf32>
    tpu.vector_store %arg11[%c0_12, %c0_13], %16 {strides = array<i32>} : memref<8x256xf32, #tpu.memory_space<vmem>>, vector<8x256xf32>,
    %c0_i32_14 = arith.constant 0 : i32
    %18 = arith.cmpi eq, %arg2, %c0_i32_14 : i32
    %19 = arith.extui %18 : i1 to i32
    %c0_i32_15 = arith.constant 0 : i32
    %20 = arith.cmpi ne, %19, %c0_i32_15 : i32
    scf.if %20 {
      %c0_16 = arith.constant 0 : index
      %c0_17 = arith.constant 0 : index
      %21 = vector.load %arg6[%c0_16, %c0_17] : memref<4x8xf32, #tpu.memory_space<vmem>>, vector<4x8xf32>
      %c0_18 = arith.constant 0 : index
      %c0_19 = arith.constant 0 : index
      %22 = vector.load %arg11[%c0_18, %c0_19] : memref<8x256xf32, #tpu.memory_space<vmem>>, vector<8x256xf32>
      %cst_20 = arith.constant dense<0.000000e+00> : vector<4x256xf32>
      %23 = tpu.matmul %21, %22, %cst_20 {dimension_numbers = #tpu.dot_dimension_numbers<[1], [0], [0], [1], [0, 0, 1, 1], [], []>} : vector<4x8xf32>, vector<8x256xf32>, vector<4x256xf32> -> vector<4x256xf32>
      %c0_21 = arith.constant 0 : index
      %c0_22 = arith.constant 0 : index
      %24 = vector.load %arg7[%c0_21, %c0_22] : memref<4x1xf32, #tpu.memory_space<vmem>>, vector<4x1xf32>
      %25 = vector.broadcast %24 : vector<4x1xf32> to vector<4x256xf32>
      %26 = arith.addf %23, %25 : vector<4x256xf32>
      %c0_23 = arith.constant 0 : index
      %c0_24 = arith.constant 0 : index
      %c0_25 = arith.constant 0 : index
      %27 = vector.load %arg8[%c0_23, %c0_24, %c0_25] : memref<1x4x256xf32, #tpu.memory_space<vmem>>, vector<1x4x256xf32>
      %28 = vector.shape_cast %27 : vector<1x4x256xf32> to vector<4x256xf32>
      %29 = vector.shape_cast %26 : vector<4x256xf32> to vector<1x4x256xf32>
      tpu.vector_store %arg8[%c0_23, %c0_24, %c0_25], %29 {strides = array<i32>} : memref<1x4x256xf32, #tpu.memory_space<vmem>>, vector<1x4x256xf32>,
      %cst_26 = arith.constant dense<0.000000e+00> : vector<4xf32>
      %30 = vector.multi_reduction <add>, %26, %cst_26 [1] : vector<4x256xf32> to vector<4xf32>
      %31 = vector.shape_cast %30 : vector<4xf32> to vector<4x1xf32>
      %c0_27 = arith.constant 0 : index
      %c0_28 = arith.constant 0 : index
      %c0_29 = arith.constant 0 : index
      %c0_30 = arith.constant 0 : index
      %32 = vector.load %arg9[%c0_27, %c0_28, %c0_29, %c0_30] : memref<1x1x4x1xf32, #tpu.memory_space<vmem>>, vector<1x1x4x1xf32>
      %33 = vector.shape_cast %32 : vector<1x1x4x1xf32> to vector<4x1xf32>
      %34 = vector.shape_cast %31 : vector<4x1xf32> to vector<1x1x4x1xf32>
      tpu.vector_store %arg9[%c0_27, %c0_28, %c0_29, %c0_30], %34 {strides = array<i32>} : memref<1x1x4x1xf32, #tpu.memory_space<vmem>>, vector<1x1x4x1xf32>,
      %35 = arith.mulf %26, %26 : vector<4x256xf32>
      %cst_31 = arith.constant dense<0.000000e+00> : vector<4xf32>
      %36 = vector.multi_reduction <add>, %35, %cst_31 [1] : vector<4x256xf32> to vector<4xf32>
      %37 = vector.shape_cast %36 : vector<4xf32> to vector<4x1xf32>
      %c0_32 = arith.constant 0 : index
      %c0_33 = arith.constant 0 : index
      %c0_34 = arith.constant 0 : index
      %c0_35 = arith.constant 0 : index
      %38 = vector.load %arg10[%c0_32, %c0_33, %c0_34, %c0_35] : memref<1x1x4x1xf32, #tpu.memory_space<vmem>>, vector<1x1x4x1xf32>
      %39 = vector.shape_cast %38 : vector<1x1x4x1xf32> to vector<4x1xf32>
      %40 = vector.shape_cast %37 : vector<4x1xf32> to vector<1x1x4x1xf32>
      tpu.vector_store %arg10[%c0_32, %c0_33, %c0_34, %c0_35], %40 {strides = array<i32>} : memref<1x1x4x1xf32, #tpu.memory_space<vmem>>, vector<1x1x4x1xf32>,
    } else {
    }
    return
  }
  func.func @transform_0(%arg0: i32, %arg1: i32, %arg2: i32) -> (i32, i32, i32) {
    %c0_i32 = arith.constant 0 : i32
    %c0_i32_0 = arith.constant 0 : i32
    return %arg0, %c0_i32, %arg1 : i32, i32, i32
  }
  func.func @transform_1(%arg0: i32, %arg1: i32, %arg2: i32) -> (i32, i32, i32) {
    %c0_i32 = arith.constant 0 : i32
    %c0_i32_0 = arith.constant 0 : i32
    return %arg0, %arg2, %c0_i32 : i32, i32, i32
  }
  func.func @transform_2(%arg0: i32, %arg1: i32, %arg2: i32) -> (i32, i32, i32) {
    %c0_i32 = arith.constant 0 : i32
    %c0_i32_0 = arith.constant 0 : i32
    return %arg0, %c0_i32, %arg2 : i32, i32, i32
  }
  func.func @transform_3(%arg0: i32, %arg1: i32, %arg2: i32) -> (i32, i32) {
    %c0_i32 = arith.constant 0 : i32
    %c0_i32_0 = arith.constant 0 : i32
    %c0_i32_1 = arith.constant 0 : i32
    return %c0_i32, %c0_i32_0 : i32, i32
  }
  func.func @transform_4(%arg0: i32, %arg1: i32, %arg2: i32) -> (i32, i32) {
    %c0_i32 = arith.constant 0 : i32
    %c0_i32_0 = arith.constant 0 : i32
    %c0_i32_1 = arith.constant 0 : i32
    return %c0_i32, %c0_i32_0 : i32, i32
  }
  func.func @transform_5(%arg0: i32, %arg1: i32, %arg2: i32) -> (i32, i32, i32) {
    %c0_i32 = arith.constant 0 : i32
    %c0_i32_0 = arith.constant 0 : i32
    return %arg0, %c0_i32, %arg1 : i32, i32, i32
  }
  func.func @transform_6(%arg0: i32, %arg1: i32, %arg2: i32) -> (i32, i32, i32, i32) {
    %c0_i32 = arith.constant 0 : i32
    %c0_i32_0 = arith.constant 0 : i32
    %c0_i32_1 = arith.constant 0 : i32
    return %arg0, %arg1, %c0_i32, %c0_i32_0 : i32, i32, i32, i32
  }
  func.func @transform_7(%arg0: i32, %arg1: i32, %arg2: i32) -> (i32, i32, i32, i32) {
    %c0_i32 = arith.constant 0 : i32
    %c0_i32_0 = arith.constant 0 : i32
    %c0_i32_1 = arith.constant 0 : i32
    return %arg0, %arg1, %c0_i32, %c0_i32_0 : i32, i32, i32, i32
  }
}

</mosaic_0001>

<llo_original>
// kernel: tpu_custom_call.1
$region0: #{tpu_custom_call.1}
  #allocation0 [shape = 'u32[]', space=smem, size = 0x4, offset = 0x4, fixed_abs, tag = 'smem constant byte address 0x4 - core index']
  #allocation1 [shape = 'u32[144,128]{1,0:T(1,128)}', space=vmem, size = 0x12000, scoped, tag = 'internal scratch']
  #allocation2 [shape = 'f32[8,256]{1,0:T(8,128)}', space=vmem, size = 0x2000, scoped, tag = 'scratch operand']
  %s0 = inlined_call_operand.vmem [shape: f32[2,1,256], index: 0, kind: input, shape index: {}]
  %s1 = inlined_call_operand.vmem [shape: f32[2,256,1], index: 1, kind: input, shape index: {}]
  %s2 = inlined_call_operand.vmem [shape: f32[2,8,256], index: 2, kind: input, shape index: {}]
  %s3 = inlined_call_operand.vmem [shape: f32[4,8], index: 3, kind: input, shape index: {}]
  %s4 = inlined_call_operand.vmem [shape: f32[4,1], index: 4, kind: input, shape index: {}]
  %s5 = inlined_call_operand.hbm [shape: f32[2,4,256], index: 5, kind: output, shape index: {0}]
  %s6 = inlined_call_operand.vmem [shape: f32[2,1,4,1], index: 6, kind: output, shape index: {1}]
  %s7 = inlined_call_operand.vmem [shape: f32[2,1,4,1], index: 7, kind: output, shape index: {2}]
  %8 = xla_tuple %s5, %s6, %s7
  %s9 = sld [smem:[#allocation0]]
  $region77: #{tpu_custom_call.1} parent=0
    _
  %s11 = ssub.s32 1, %s9
  %s12 = scalar_select 0, %s11, %s9
  $region1: #{tpu_custom_call.1} parent=0
    #allocation3 [shape = 'u8[8192]{0}', space=vmem, size = 0x2000, scoped, tag = 'output window, operand 0']
    #allocation4 [shape = 's32[2]{0}', space=sflag, size = 0x8, scoped, tag = 'scoped memory for tpu_custom_call.1']
    %13 = vsyncpa [#allocation4], 0
    %s14 = scalar_lea.sflag [#allocation4], 1
    %15 = vsyncpa %s14, 0
    loop: start=0, step=1, limit=4
    $region2: #{tpu_custom_call.1} parent=1 // loop_pre_header
      _
    $region3: #{tpu_custom_call.1} parent=1 // loop_header
      %s17 = sphi 0, %s21
      %p18 = scmp.ge.s32.totalorder %s17, 4
      %s24 = sphi 0, %s43
      %s25 = sphi 0, %s39
      %s26 = sphi 0, %s35
      %s27 = sphi 0, %s24
      %s28 = sphi 0, %s25
      %s29 = sphi 0, %s26
      %s30 = sphi 0, %s27
      %s31 = sphi 0, %s28
      %s32 = sphi 0, %s29
      %s48 = sphi 0, %s50
      %s51 = sphi 0, %s48
      %s52 = sphi 0, %s51
      %s68 = sphi 0, %s52
      %s76 = sphi 0, %s78
      %s79 = sphi 0, %s76
      %s80 = sphi 0, %s79
      %s96 = sphi 0, %s80
      %s104 = sphi 0, %s106
      %s107 = sphi 0, %s104
      %s108 = sphi 0, %s107
      %s124 = sphi 0, %s108
      %s128 = sphi 0, %s128
      %s130 = sphi 0, %s128
      %s131 = sphi 0, %s130
      %s145 = sphi 0, %s131
      %s149 = sphi 0, %s149
      %s151 = sphi 0, %s149
      %s152 = sphi 0, %s151
      %s166 = sphi 0, %s152
      %s174 = sphi 0, %s176
      %s177 = sphi 0, %s174
      %s178 = sphi 0, %s177
      %s194 = sphi 0, %s178
      %s202 = sphi 0, %s204
      %s205 = sphi 0, %s202
      %s206 = sphi 0, %s205
      %s222 = sphi 0, %s206
      %s230 = sphi 0, %s232
      %s233 = sphi 0, %s230
      %s234 = sphi 0, %s233
      %s250 = sphi 0, %s234
    $region4: #{tpu_custom_call.1} parent=1 // loop_header_branch
      %20 = sbr.rel (%p18) target = $region8
    $region5: #{tpu_custom_call.1} parent=1 // loop_body
      %s22 = ssub.s32 %s17, 1
      %s23 = ssub.s32 %s17, 2
      %s33 = sadd.s32 1, %s26
      %p34 = scmp.ge.s32.totalorder %s33, 1
      %s35 = scalar_select %p34, 0, %s33
      %s36 = sadd.s32 1, %s25
      %s37 = scalar_select %p34, %s36, %s25
      %p38 = scmp.ge.s32.totalorder %s37, 1
      %s39 = scalar_select %p38, 0, %s37
      %s40 = sadd.s32 1, %s24
      %s41 = scalar_select %p38, %s40, %s24
      %p42 = scmp.ge.s32.totalorder %s41, 2
      %s43 = scalar_select %p42, 0, %s41
      %s44 = ssub.s32 %s24, %s43
      %s45 = ssub.s32 %s25, %s39
      %s46 = sor.u32 %s44, %s45
      %p47 = scmp.eq.s32.totalorder %s46, 0
      %s49 = sadd.s32 %s48, 1
      %s50 = scalar_select %p47, %s48, %s49
      %p53 = pneg %p47
      %p54 = scmp.eq.s32.totalorder %s17, 1
      %p55 = por %p53, %p54
      %p56 = scmp.ne.s32.totalorder %s48, %s51
      %p57 = scmp.eq.s32.totalorder %s17, 0
      %p58 = por %p56, %p57
      %p59 = scmp.ne.s32.totalorder %s48, %s51
      %p60 = scmp.eq.s32.totalorder %s22, 1
      %p61 = por %p59, %p60
      %p62 = scmp.ne.s32.totalorder %s51, %s52
      %p63 = scmp.eq.s32.totalorder %s22, 0
      %p64 = por %p62, %p63
      %p65 = scmp.ne.s32.totalorder %s51, %s52
      %p66 = scmp.eq.s32.totalorder %s23, 1
      %p67 = por %p65, %p66
      %p69 = scmp.ne.s32.totalorder %s52, %s68
      %p70 = scmp.eq.s32.totalorder %s23, 0
      %p71 = por %p69, %p70
      %s72 = ssub.s32 %s24, %s43
      %s73 = ssub.s32 %s26, %s35
      %s74 = sor.u32 %s72, %s73
      %p75 = scmp.eq.s32.totalorder %s74, 0
      %s77 = sadd.s32 %s76, 1
      %s78 = scalar_select %p75, %s76, %s77
      %p81 = pneg %p75
      %p82 = scmp.eq.s32.totalorder %s17, 1
      %p83 = por %p81, %p82
      %p84 = scmp.ne.s32.totalorder %s76, %s79
      %p85 = scmp.eq.s32.totalorder %s17, 0
      %p86 = por %p84, %p85
      %p87 = scmp.ne.s32.totalorder %s76, %s79
      %p88 = scmp.eq.s32.totalorder %s22, 1
      %p89 = por %p87, %p88
      %p90 = scmp.ne.s32.totalorder %s79, %s80
      %p91 = scmp.eq.s32.totalorder %s22, 0
      %p92 = por %p90, %p91
      %p93 = scmp.ne.s32.totalorder %s79, %s80
      %p94 = scmp.eq.s32.totalorder %s23, 1
      %p95 = por %p93, %p94
      %p97 = scmp.ne.s32.totalorder %s80, %s96
      %p98 = scmp.eq.s32.totalorder %s23, 0
      %p99 = por %p97, %p98
      %s100 = ssub.s32 %s24, %s43
      %s101 = ssub.s32 %s26, %s35
      %s102 = sor.u32 %s100, %s101
      %p103 = scmp.eq.s32.totalorder %s102, 0
      %s105 = sadd.s32 %s104, 1
      %s106 = scalar_select %p103, %s104, %s105
      %p109 = pneg %p103
      %p110 = scmp.eq.s32.totalorder %s17, 1
      %p111 = por %p109, %p110
      %p112 = scmp.ne.s32.totalorder %s104, %s107
      %p113 = scmp.eq.s32.totalorder %s17, 0
      %p114 = por %p112, %p113
      %p115 = scmp.ne.s32.totalorder %s104, %s107
      %p116 = scmp.eq.s32.totalorder %s22, 1
      %p117 = por %p115, %p116
      %p118 = scmp.ne.s32.totalorder %s107, %s108
      %p119 = scmp.eq.s32.totalorder %s22, 0
      %p120 = por %p118, %p119
      %p121 = scmp.ne.s32.totalorder %s107, %s108
      %p122 = scmp.eq.s32.totalorder %s23, 1
      %p123 = por %p121, %p122
      %p125 = scmp.ne.s32.totalorder %s108, %s124
      %p126 = scmp.eq.s32.totalorder %s23, 0
      %p127 = por %p125, %p126
      %s129 = sadd.s32 %s128, 1
      %p132 = scmp.eq.s32.totalorder %s17, 1
      %p133 = scmp.ne.s32.totalorder %s128, %s130
      %p134 = scmp.eq.s32.totalorder %s17, 0
      %p135 = por %p133, %p134
      %p136 = scmp.ne.s32.totalorder %s128, %s130
      %p137 = scmp.eq.s32.totalorder %s22, 1
      %p138 = por %p136, %p137
      %p139 = scmp.ne.s32.totalorder %s130, %s131
      %p140 = scmp.eq.s32.totalorder %s22, 0
      %p141 = por %p139, %p140
      %p142 = scmp.ne.s32.totalorder %s130, %s131
      %p143 = scmp.eq.s32.totalorder %s23, 1
      %p144 = por %p142, %p143
      %p146 = scmp.ne.s32.totalorder %s131, %s145
      %p147 = scmp.eq.s32.totalorder %s23, 0
      %p148 = por %p146, %p147
      %s150 = sadd.s32 %s149, 1
      %p153 = scmp.eq.s32.totalorder %s17, 1
      %p154 = scmp.ne.s32.totalorder %s149, %s151
      %p155 = scmp.eq.s32.totalorder %s17, 0
      %p156 = por %p154, %p155
      %p157 = scmp.ne.s32.totalorder %s149, %s151
      %p158 = scmp.eq.s32.totalorder %s22, 1
      %p159 = por %p157, %p158
      %p160 = scmp.ne.s32.totalorder %s151, %s152
      %p161 = scmp.eq.s32.totalorder %s22, 0
      %p162 = por %p160, %p161
      %p163 = scmp.ne.s32.totalorder %s151, %s152
      %p164 = scmp.eq.s32.totalorder %s23, 1
      %p165 = por %p163, %p164
      %p167 = scmp.ne.s32.totalorder %s152, %s166
      %p168 = scmp.eq.s32.totalorder %s23, 0
      %p169 = por %p167, %p168
      %s170 = ssub.s32 %s24, %s43
      %s171 = ssub.s32 %s25, %s39
      %s172 = sor.u32 %s170, %s171
      %p173 = scmp.eq.s32.totalorder %s172, 0
      %s175 = sadd.s32 %s174, 1
      %s176 = scalar_select %p173, %s174, %s175
      %p179 = pneg %p173
      %p180 = scmp.eq.s32.totalorder %s17, 1
      %p181 = por %p179, %p180
      %p182 = scmp.ne.s32.totalorder %s174, %s177
      %p183 = scmp.eq.s32.totalorder %s17, 0
      %p184 = por %p182, %p183
      %p185 = scmp.ne.s32.totalorder %s174, %s177
      %p186 = scmp.eq.s32.totalorder %s22, 1
      %p187 = por %p185, %p186
      %p188 = scmp.ne.s32.totalorder %s177, %s178
      %p189 = scmp.eq.s32.totalorder %s22, 0
      %p190 = por %p188, %p189
      %p191 = scmp.ne.s32.totalorder %s177, %s178
      %p192 = scmp.eq.s32.totalorder %s23, 1
      %p193 = por %p191, %p192
      %p195 = scmp.ne.s32.totalorder %s178, %s194
      %p196 = scmp.eq.s32.totalorder %s23, 0
      %p197 = por %p195, %p196
      %s198 = ssub.s32 %s24, %s43
      %s199 = ssub.s32 %s25, %s39
      %s200 = sor.u32 %s198, %s199
      %p201 = scmp.eq.s32.totalorder %s200, 0
      %s203 = sadd.s32 %s202, 1
      %s204 = scalar_select %p201, %s202, %s203
      %p207 = pneg %p201
      %p208 = scmp.eq.s32.totalorder %s17, 1
      %p209 = por %p207, %p208
      %p210 = scmp.ne.s32.totalorder %s202, %s205
      %p211 = scmp.eq.s32.totalorder %s17, 0
      %p212 = por %p210, %p211
      %p213 = scmp.ne.s32.totalorder %s202, %s205
      %p214 = scmp.eq.s32.totalorder %s22, 1
      %p215 = por %p213, %p214
      %p216 = scmp.ne.s32.totalorder %s205, %s206
      %p217 = scmp.eq.s32.totalorder %s22, 0
      %p218 = por %p216, %p217
      %p219 = scmp.ne.s32.totalorder %s205, %s206
      %p220 = scmp.eq.s32.totalorder %s23, 1
      %p221 = por %p219, %p220
      %p223 = scmp.ne.s32.totalorder %s206, %s222
      %p224 = scmp.eq.s32.totalorder %s23, 0
      %p225 = por %p223, %p224
      %s226 = ssub.s32 %s24, %s43
      %s227 = ssub.s32 %s25, %s39
      %s228 = sor.u32 %s226, %s227
      %p229 = scmp.eq.s32.totalorder %s228, 0
      %s231 = sadd.s32 %s230, 1
      %s232 = scalar_select %p229, %s230, %s231
      %p235 = pneg %p229
      %p236 = scmp.eq.s32.totalorder %s17, 1
      %p237 = por %p235, %p236
      %p238 = scmp.ne.s32.totalorder %s230, %s233
      %p239 = scmp.eq.s32.totalorder %s17, 0
      %p240 = por %p238, %p239
      %p241 = scmp.ne.s32.totalorder %s230, %s233
      %p242 = scmp.eq.s32.totalorder %s22, 1
      %p243 = por %p241, %p242
      %p244 = scmp.ne.s32.totalorder %s233, %s234
      %p245 = scmp.eq.s32.totalorder %s22, 0
      %p246 = por %p244, %p245
      %p247 = scmp.ne.s32.totalorder %s233, %s234
      %p248 = scmp.eq.s32.totalorder %s23, 1
      %p249 = por %p247, %p248
      %p251 = scmp.ne.s32.totalorder %s234, %s250
      %p252 = scmp.eq.s32.totalorder %s23, 0
      %p253 = por %p251, %p252
      %p254 = scmp.le.s32.totalorder 1, %s17
      %p255 = scmp.lt.s32.totalorder %s17, 3
      %p256 = pnand %p254, %p255
      %p257 = pneg %p256
      // Predicated region
      $region9: #{tpu_custom_call.1} parent=5 // pred_check
        _
      $region10: #{tpu_custom_call.1} parent=5 // pred_check_branch
        %259 = sbr.rel (%p256) target = $region12
      $region11: #{tpu_custom_call.1} parent=5 // pred_region
        %s260 = ssub.s32 %s17, 1
        // Predicated region
        $region13: #{tpu_custom_call.1} parent=11 // pred_check
          %p261 = pneg %p141
        $region14: #{tpu_custom_call.1} parent=11 // pred_check_branch
          %263 = sbr.rel (%p261) target = $region16
        $region15: #{tpu_custom_call.1} parent=11 // pred_region
          _
        $region16: #{tpu_custom_call.1} parent=11 // pred_fallthru
          _
        // Predicated region
        $region17: #{tpu_custom_call.1} parent=11 // pred_check
          %p264 = pneg %p162
        $region18: #{tpu_custom_call.1} parent=11 // pred_check_branch
          %266 = sbr.rel (%p264) target = $region20
        $region19: #{tpu_custom_call.1} parent=11 // pred_region
          _
        $region20: #{tpu_custom_call.1} parent=11 // pred_fallthru
          _
      $region12: #{tpu_custom_call.1} parent=5 // pred_fallthru
        _
      %p267 = scmp.lt.s32.totalorder %s17, 2
      // Predicated region
      $region21: #{tpu_custom_call.1} parent=5 // pred_check
        %p268 = pneg %p267
      $region22: #{tpu_custom_call.1} parent=5 // pred_check_branch
        %270 = sbr.rel (%p268) target = $region24
      $region23: #{tpu_custom_call.1} parent=5 // pred_region
        // Predicated region
        $region25: #{tpu_custom_call.1} parent=23 // pred_check
          %p271 = pneg %p58
        $region26: #{tpu_custom_call.1} parent=23 // pred_check_branch
          %273 = sbr.rel (%p271) target = $region28
        $region27: #{tpu_custom_call.1} parent=23 // pred_region
          %s274 = smul.u32 2, %s25
          %p275 = scmp.lt.s32.totalorder %s24, 1
          %s276 = scalar_select %p275, %s24, 1
          %p277 = scmp.lt.s32.totalorder %s274, 1
          %s278 = scalar_select %p277, %s274, 1
          %s279 = smul.addr %s276, 2
          %s280 = sadd.s32 %s278, %s279
          %s281 = scalar_lea.vmem %s0, %s280
          %s282 = smul.u32 2, %s25
        $region28: #{tpu_custom_call.1} parent=23 // pred_fallthru
          _
        // Predicated region
        $region29: #{tpu_custom_call.1} parent=23 // pred_check
          %p283 = pneg %p86
        $region30: #{tpu_custom_call.1} parent=23 // pred_check_branch
          %285 = sbr.rel (%p283) target = $region32
        $region31: #{tpu_custom_call.1} parent=23 // pred_region
          %s286 = smul.u32 32, %s26
          %p287 = scmp.lt.s32.totalorder %s24, 1
          %s288 = scalar_select %p287, %s24, 1
          %p289 = scmp.lt.s32.totalorder %s286, 31
          %s290 = scalar_select %p289, %s286, 31
          %s291 = smul.addr %s288, 32
          %s292 = sadd.s32 %s290, %s291
          %s293 = smul.addr %s292, 8
          %s294 = scalar_lea.vmem %s1, %s293
          %s295 = smul.u32 32, %s26
        $region32: #{tpu_custom_call.1} parent=23 // pred_fallthru
          _
        // Predicated region
        $region33: #{tpu_custom_call.1} parent=23 // pred_check
          %p296 = pneg %p114
        $region34: #{tpu_custom_call.1} parent=23 // pred_check_branch
          %298 = sbr.rel (%p296) target = $region36
        $region35: #{tpu_custom_call.1} parent=23 // pred_region
          %s299 = smul.u32 2, %s26
          %p300 = scmp.lt.s32.totalorder %s24, 1
          %s301 = scalar_select %p300, %s24, 1
          %p302 = scmp.lt.s32.totalorder %s299, 1
          %s303 = scalar_select %p302, %s299, 1
          %s304 = smul.addr %s301, 2
          %s305 = sadd.s32 %s303, %s304
          %s306 = smul.addr %s305, 8
          %s307 = scalar_lea.vmem %s2, %s306
          %s308 = smul.u32 2, %s26
        $region36: #{tpu_custom_call.1} parent=23 // pred_fallthru
          _
      $region24: #{tpu_custom_call.1} parent=5 // pred_fallthru
        _
      %p309 = scmp.le.s32.totalorder 1, %s17
      %p310 = scmp.lt.s32.totalorder %s17, 3
      %p311 = pnand %p309, %p310
      %p312 = pneg %p311
      // Predicated region
      $region37: #{tpu_custom_call.1} parent=5 // pred_check
        _
      $region38: #{tpu_custom_call.1} parent=5 // pred_check_branch
        %314 = sbr.rel (%p311) target = $region40
      $region39: #{tpu_custom_call.1} parent=5 // pred_region
        %s315 = ssub.s32 %s17, 1
        %s316 = smul.u32 2, %s28
        %p317 = scmp.lt.s32.totalorder %s27, 1
        %s318 = scalar_select %p317, %s27, 1
        %p319 = scmp.lt.s32.totalorder %s316, 1
        %s320 = scalar_select %p319, %s316, 1
        %s321 = smul.addr %s318, 2
        %s322 = sadd.s32 %s320, %s321
        %s323 = scalar_lea.vmem %s0, %s322
        %p324 = pneg %p64
        %p325 = pneg %p61
        %s326 = smul.u32 32, %s29
        %p327 = scmp.lt.s32.totalorder %s27, 1
        %s328 = scalar_select %p327, %s27, 1
        %p329 = scmp.lt.s32.totalorder %s326, 31
        %s330 = scalar_select %p329, %s326, 31
        %s331 = smul.addr %s328, 32
        %s332 = sadd.s32 %s330, %s331
        %s333 = smul.addr %s332, 8
        %s334 = scalar_lea.vmem %s1, %s333
        %p335 = pneg %p92
        %p336 = pneg %p89
        %s337 = smul.u32 2, %s29
        %p338 = scmp.lt.s32.totalorder %s27, 1
        %s339 = scalar_select %p338, %s27, 1
        %p340 = scmp.lt.s32.totalorder %s337, 1
        %s341 = scalar_select %p340, %s337, 1
        %s342 = smul.addr %s339, 2
        %s343 = sadd.s32 %s341, %s342
        %s344 = smul.addr %s343, 8
        %s345 = scalar_lea.vmem %s2, %s344
        %p346 = pneg %p120
        %p347 = pneg %p117
        %p348 = pneg %p141
        %p349 = pneg %p138
        %p350 = pneg %p162
        %p351 = pneg %p159
        %p352 = pneg %p190
        %p353 = pneg %p187
        %s354 = sand.u32 %s177, 1
        %s355 = scalar_lea.sflag [#allocation4], %s354
        %s356 = sand.u32 %s177, 1
        %s357 = smul.addr %s356, 8
        %s358 = scalar_lea.vmem [#allocation3], %s357
        %p359 = pneg %p218
        %p360 = pneg %p215
        %p361 = scmp.lt.s32.totalorder %s27, 1
        %s362 = scalar_select %p361, %s27, 1
        %p363 = scmp.lt.s32.totalorder %s28, 0
        %s364 = scalar_select %p363, %s28, 0
        %s365 = sadd.s32 %s364, %s362
        %s366 = smul.addr %s365, 4
        %s367 = scalar_lea.vmem %s6, %s366
        %p368 = pneg %p246
        %p369 = pneg %p243
        %p370 = scmp.lt.s32.totalorder %s27, 1
        %s371 = scalar_select %p370, %s27, 1
        %p372 = scmp.lt.s32.totalorder %s28, 0
        %s373 = scalar_select %p372, %s28, 0
        %s374 = sadd.s32 %s373, %s371
        %s375 = smul.addr %s374, 4
        %s376 = scalar_lea.vmem %s7, %s375
        %s377 = smul.u32 2, %s28
        %p378 = scmp.lt.s32.totalorder %s27, 1
        %s379 = scalar_select %p378, %s27, 1
        %p380 = scmp.lt.s32.totalorder %s377, 1
        %s381 = scalar_select %p380, %s377, 1
        %s382 = smul.addr %s379, 2
        %s383 = sadd.s32 %s381, %s382
        %s384 = scalar_lea.vmem %s0, %s383
        %s385 = smul.u32 2, %s28
        %s386 = smul.u32 32, %s29
        %p387 = scmp.lt.s32.totalorder %s27, 1
        %s388 = scalar_select %p387, %s27, 1
        %p389 = scmp.lt.s32.totalorder %s386, 31
        %s390 = scalar_select %p389, %s386, 31
        %s391 = smul.addr %s388, 32
        %s392 = sadd.s32 %s390, %s391
        %s393 = smul.addr %s392, 8
        %s394 = scalar_lea.vmem %s1, %s393
        %s395 = smul.u32 32, %s29
        %s396 = smul.u32 2, %s29
        %p397 = scmp.lt.s32.totalorder %s27, 1
        %s398 = scalar_select %p397, %s27, 1
        %p399 = scmp.lt.s32.totalorder %s396, 1
        %s400 = scalar_select %p399, %s396, 1
        %s401 = smul.addr %s398, 2
        %s402 = sadd.s32 %s400, %s401
        %s403 = smul.addr %s402, 8
        %s404 = scalar_lea.vmem %s2, %s403
        %s405 = smul.u32 2, %s29
        %s406 = smul.u32 2, %s28
        %p407 = scmp.lt.s32.totalorder %s27, 1
        %s408 = scalar_select %p407, %s27, 1
        %p409 = scmp.lt.s32.totalorder %s28, 0
        %s410 = scalar_select %p409, %s28, 0
        %s411 = sadd.s32 %s410, %s408
        %s412 = smul.addr %s411, 4
        %s413 = scalar_lea.vmem %s6, %s412
        %p414 = scmp.lt.s32.totalorder %s27, 1
        %s415 = scalar_select %p414, %s27, 1
        %p416 = scmp.lt.s32.totalorder %s28, 0
        %s417 = scalar_select %p416, %s28, 0
        %s418 = sadd.s32 %s417, %s415
        %s419 = smul.addr %s418, 4
        %s420 = scalar_lea.vmem %s7, %s419
        %p421 = scmp.eq.s32.totalorder %s29, 0
        // Predicated region
        $region41: #{tpu_custom_call.1} parent=39 // pred_check
          %p422 = pneg %p421
        $region42: #{tpu_custom_call.1} parent=39 // pred_check_branch
          %424 = sbr.rel (%p422) target = $region44
        $region43: #{tpu_custom_call.1} parent=39 // pred_region
          %425 = vst [vmem:[#allocation2] sm:$0xff] 0.0
          %426 = vst [vmem:[#allocation2 + $0x8] sm:$0xff] 0.0
        $region44: #{tpu_custom_call.1} parent=39 // pred_fallthru
          _
        %v427 = vld [vmem:[%s384] sm:$0x3]
        %v428 = vld [vmem:[%s394] sm:$0xff]
        %v429 = vld [vmem:[%s394 + $0x8] sm:$0xff]
        %v430 = vld [vmem:[%s394 + $0x10] sm:$0xff]
        %v431 = vld [vmem:[%s394 + $0x18] sm:$0xff]
        %v432 = vld [vmem:[%s394 + $0x20] sm:$0xff]
        %v433 = vld [vmem:[%s394 + $0x28] sm:$0xff]
        %v434 = vld [vmem:[%s394 + $0x30] sm:$0xff]
        %v435 = vld [vmem:[%s394 + $0x38] sm:$0xff]
        %v436 = vld [vmem:[%s394 + $0x40] sm:$0xff]
        %v437 = vld [vmem:[%s394 + $0x48] sm:$0xff]
        %v438 = vld [vmem:[%s394 + $0x50] sm:$0xff]
        %v439 = vld [vmem:[%s394 + $0x58] sm:$0xff]
        %v440 = vld [vmem:[%s394 + $0x60] sm:$0xff]
        %v441 = vld [vmem:[%s394 + $0x68] sm:$0xff]
        %v442 = vld [vmem:[%s394 + $0x70] sm:$0xff]
        %v443 = vld [vmem:[%s394 + $0x78] sm:$0xff]
        %v444 = vld [vmem:[%s394 + $0x80] sm:$0xff]
        %v445 = vld [vmem:[%s394 + $0x88] sm:$0xff]
        %v446 = vld [vmem:[%s394 + $0x90] sm:$0xff]
        %v447 = vld [vmem:[%s394 + $0x98] sm:$0xff]
        %v448 = vld [vmem:[%s394 + $0xa0] sm:$0xff]
        %v449 = vld [vmem:[%s394 + $0xa8] sm:$0xff]
        %v450 = vld [vmem:[%s394 + $0xb0] sm:$0xff]
        %v451 = vld [vmem:[%s394 + $0xb8] sm:$0xff]
        %v452 = vld [vmem:[%s394 + $0xc0] sm:$0xff]
        %v453 = vld [vmem:[%s394 + $0xc8] sm:$0xff]
        %v454 = vld [vmem:[%s394 + $0xd0] sm:$0xff]
        %v455 = vld [vmem:[%s394 + $0xd8] sm:$0xff]
        %v456 = vld [vmem:[%s394 + $0xe0] sm:$0xff]
        %v457 = vld [vmem:[%s394 + $0xe8] sm:$0xff]
        %v458 = vld [vmem:[%s394 + $0xf0] sm:$0xff]
        %v459 = vld [vmem:[%s394 + $0xf8] sm:$0xff]
        %v460 = vld [vmem:[%s404] sm:$0xff]
        %v461 = vld [vmem:[%s404 + $0x8] sm:$0xff]
        %463 = vset.pattern.permute.xlu0 0
        %464 = vperm.xlu0 %463, %v428
        %v465 = vpop.permute.xlu0 %464
        %468 = vset.pattern.permute.xlu0 0
        %469 = vperm.xlu0 %468, %v429
        %v470 = vpop.permute.xlu0 %469
        %473 = vset.pattern.permute.xlu0 0
        %474 = vperm.xlu0 %473, %v430
        %v475 = vpop.permute.xlu0 %474
        %478 = vset.pattern.permute.xlu0 0
        %479 = vperm.xlu0 %478, %v431
        %v480 = vpop.permute.xlu0 %479
        %483 = vset.pattern.permute.xlu0 0
        %484 = vperm.xlu0 %483, %v432
        %v485 = vpop.permute.xlu0 %484
        %488 = vset.pattern.permute.xlu0 0
        %489 = vperm.xlu0 %488, %v433
        %v490 = vpop.permute.xlu0 %489
        %493 = vset.pattern.permute.xlu0 0
        %494 = vperm.xlu0 %493, %v434
        %v495 = vpop.permute.xlu0 %494
        %498 = vset.pattern.permute.xlu0 0
        %499 = vperm.xlu0 %498, %v435
        %v500 = vpop.permute.xlu0 %499
        %503 = vset.pattern.permute.xlu0 0
        %504 = vperm.xlu0 %503, %v436
        %v505 = vpop.permute.xlu0 %504
        %508 = vset.pattern.permute.xlu0 0
        %509 = vperm.xlu0 %508, %v437
        %v510 = vpop.permute.xlu0 %509
        %513 = vset.pattern.permute.xlu0 0
        %514 = vperm.xlu0 %513, %v438
        %v515 = vpop.permute.xlu0 %514
        %518 = vset.pattern.permute.xlu0 0
        %519 = vperm.xlu0 %518, %v439
        %v520 = vpop.permute.xlu0 %519
        %523 = vset.pattern.permute.xlu0 0
        %524 = vperm.xlu0 %523, %v440
        %v525 = vpop.permute.xlu0 %524
        %528 = vset.pattern.permute.xlu0 0
        %529 = vperm.xlu0 %528, %v441
        %v530 = vpop.permute.xlu0 %529
        %533 = vset.pattern.permute.xlu0 0
        %534 = vperm.xlu0 %533, %v442
        %v535 = vpop.permute.xlu0 %534
        %538 = vset.pattern.permute.xlu0 0
        %539 = vperm.xlu0 %538, %v443
        %v540 = vpop.permute.xlu0 %539
        %543 = vset.pattern.permute.xlu0 0
        %544 = vperm.xlu0 %543, %v444
        %v545 = vpop.permute.xlu0 %544
        %548 = vset.pattern.permute.xlu0 0
        %549 = vperm.xlu0 %548, %v445
        %v550 = vpop.permute.xlu0 %549
        %553 = vset.pattern.permute.xlu0 0
        %554 = vperm.xlu0 %553, %v446
        %v555 = vpop.permute.xlu0 %554
        %558 = vset.pattern.permute.xlu0 0
        %559 = vperm.xlu0 %558, %v447
        %v560 = vpop.permute.xlu0 %559
        %563 = vset.pattern.permute.xlu0 0
        %564 = vperm.xlu0 %563, %v448
        %v565 = vpop.permute.xlu0 %564
        %568 = vset.pattern.permute.xlu0 0
        %569 = vperm.xlu0 %568, %v449
        %v570 = vpop.permute.xlu0 %569
        %573 = vset.pattern.permute.xlu0 0
        %574 = vperm.xlu0 %573, %v450
        %v575 = vpop.permute.xlu0 %574
        %578 = vset.pattern.permute.xlu0 0
        %579 = vperm.xlu0 %578, %v451
        %v580 = vpop.permute.xlu0 %579
        %583 = vset.pattern.permute.xlu0 0
        %584 = vperm.xlu0 %583, %v452
        %v585 = vpop.permute.xlu0 %584
        %588 = vset.pattern.permute.xlu0 0
        %589 = vperm.xlu0 %588, %v453
        %v590 = vpop.permute.xlu0 %589
        %593 = vset.pattern.permute.xlu0 0
        %594 = vperm.xlu0 %593, %v454
        %v595 = vpop.permute.xlu0 %594
        %598 = vset.pattern.permute.xlu0 0
        %599 = vperm.xlu0 %598, %v455
        %v600 = vpop.permute.xlu0 %599
        %603 = vset.pattern.permute.xlu0 0
        %604 = vperm.xlu0 %603, %v456
        %v605 = vpop.permute.xlu0 %604
        %608 = vset.pattern.permute.xlu0 0
        %609 = vperm.xlu0 %608, %v457
        %v610 = vpop.permute.xlu0 %609
        %613 = vset.pattern.permute.xlu0 0
        %614 = vperm.xlu0 %613, %v458
        %v615 = vpop.permute.xlu0 %614
        %618 = vset.pattern.permute.xlu0 0
        %619 = vperm.xlu0 %618, %v459
        %v620 = vpop.permute.xlu0 %619
        %v623 = vlaneseq
        %v624 = vshrl.u32 %v623, 7
        %v625 = vsub.s32 0, %v624
        %v626 = vrot.slane %v427, %v625
        %v627 = vlaneseq
        %v628 = vshrl.u32 %v627, 7
        %v629 = vsub.s32 1, %v628
        %v630 = vrot.slane %v427, %v629
        %v633 = vadd.f32 %v465, %v626
        %v634 = vadd.f32 %v465, %v630
        %v635 = vadd.f32 %v470, %v626
        %v636 = vadd.f32 %v470, %v630
        %v637 = vadd.f32 %v475, %v626
        %v638 = vadd.f32 %v475, %v630
        %v639 = vadd.f32 %v480, %v626
        %v640 = vadd.f32 %v480, %v630
        %v641 = vadd.f32 %v485, %v626
        %v642 = vadd.f32 %v485, %v630
        %v643 = vadd.f32 %v490, %v626
        %v644 = vadd.f32 %v490, %v630
        %v645 = vadd.f32 %v495, %v626
        %v646 = vadd.f32 %v495, %v630
        %v647 = vadd.f32 %v500, %v626
        %v648 = vadd.f32 %v500, %v630
        %v649 = vadd.f32 %v505, %v626
        %v650 = vadd.f32 %v505, %v630
        %v651 = vadd.f32 %v510, %v626
        %v652 = vadd.f32 %v510, %v630
        %v653 = vadd.f32 %v515, %v626
        %v654 = vadd.f32 %v515, %v630
        %v655 = vadd.f32 %v520, %v626
        %v656 = vadd.f32 %v520, %v630
        %v657 = vadd.f32 %v525, %v626
        %v658 = vadd.f32 %v525, %v630
        %v659 = vadd.f32 %v530, %v626
        %v660 = vadd.f32 %v530, %v630
        %v661 = vadd.f32 %v535, %v626
        %v662 = vadd.f32 %v535, %v630
        %v663 = vadd.f32 %v540, %v626
        %v664 = vadd.f32 %v540, %v630
        %v665 = vadd.f32 %v545, %v626
        %v666 = vadd.f32 %v545, %v630
        %v667 = vadd.f32 %v550, %v626
        %v668 = vadd.f32 %v550, %v630
        %v669 = vadd.f32 %v555, %v626
        %v670 = vadd.f32 %v555, %v630
        %v671 = vadd.f32 %v560, %v626
        %v672 = vadd.f32 %v560, %v630
        %v673 = vadd.f32 %v565, %v626
        %v674 = vadd.f32 %v565, %v630
        %v675 = vadd.f32 %v570, %v626
        %v676 = vadd.f32 %v570, %v630
        %v677 = vadd.f32 %v575, %v626
        %v678 = vadd.f32 %v575, %v630
        %v679 = vadd.f32 %v580, %v626
        %v680 = vadd.f32 %v580, %v630
        %v681 = vadd.f32 %v585, %v626
        %v682 = vadd.f32 %v585, %v630
        %v683 = vadd.f32 %v590, %v626
        %v684 = vadd.f32 %v590, %v630
        %v685 = vadd.f32 %v595, %v626
        %v686 = vadd.f32 %v595, %v630
        %v687 = vadd.f32 %v600, %v626
        %v688 = vadd.f32 %v600, %v630
        %v689 = vadd.f32 %v605, %v626
        %v690 = vadd.f32 %v605, %v630
        %v691 = vadd.f32 %v610, %v626
        %v692 = vadd.f32 %v610, %v630
        %v693 = vadd.f32 %v615, %v626
        %v694 = vadd.f32 %v615, %v630
        %v695 = vadd.f32 %v620, %v626
        %v696 = vadd.f32 %v620, %v630
        %v697 = vmax.f32 %v633, 0.0
        %v698 = vmax.f32 %v634, 0.0
        %v699 = vmax.f32 %v635, 0.0
        %v700 = vmax.f32 %v636, 0.0
        %v701 = vmax.f32 %v637, 0.0
        %v702 = vmax.f32 %v638, 0.0
        %v703 = vmax.f32 %v639, 0.0
        %v704 = vmax.f32 %v640, 0.0
        %v705 = vmax.f32 %v641, 0.0
        %v706 = vmax.f32 %v642, 0.0
        %v707 = vmax.f32 %v643, 0.0
        %v708 = vmax.f32 %v644, 0.0
        %v709 = vmax.f32 %v645, 0.0
        %v710 = vmax.f32 %v646, 0.0
        %v711 = vmax.f32 %v647, 0.0
        %v712 = vmax.f32 %v648, 0.0
        %v713 = vmax.f32 %v649, 0.0
        %v714 = vmax.f32 %v650, 0.0
        %v715 = vmax.f32 %v651, 0.0
        %v716 = vmax.f32 %v652, 0.0
        %v717 = vmax.f32 %v653, 0.0
        %v718 = vmax.f32 %v654, 0.0
        %v719 = vmax.f32 %v655, 0.0
        %v720 = vmax.f32 %v656, 0.0
        %v721 = vmax.f32 %v657, 0.0
        %v722 = vmax.f32 %v658, 0.0
        %v723 = vmax.f32 %v659, 0.0
        %v724 = vmax.f32 %v660, 0.0
        %v725 = vmax.f32 %v661, 0.0
        %v726 = vmax.f32 %v662, 0.0
        %v727 = vmax.f32 %v663, 0.0
        %v728 = vmax.f32 %v664, 0.0
        %v729 = vmax.f32 %v665, 0.0
        %v730 = vmax.f32 %v666, 0.0
        %v731 = vmax.f32 %v667, 0.0
        %v732 = vmax.f32 %v668, 0.0
        %v733 = vmax.f32 %v669, 0.0
        %v734 = vmax.f32 %v670, 0.0
        %v735 = vmax.f32 %v671, 0.0
        %v736 = vmax.f32 %v672, 0.0
        %v737 = vmax.f32 %v673, 0.0
        %v738 = vmax.f32 %v674, 0.0
        %v739 = vmax.f32 %v675, 0.0
        %v740 = vmax.f32 %v676, 0.0
        %v741 = vmax.f32 %v677, 0.0
        %v742 = vmax.f32 %v678, 0.0
        %v743 = vmax.f32 %v679, 0.0
        %v744 = vmax.f32 %v680, 0.0
        %v745 = vmax.f32 %v681, 0.0
        %v746 = vmax.f32 %v682, 0.0
        %v747 = vmax.f32 %v683, 0.0
        %v748 = vmax.f32 %v684, 0.0
        %v749 = vmax.f32 %v685, 0.0
        %v750 = vmax.f32 %v686, 0.0
        %v751 = vmax.f32 %v687, 0.0
        %v752 = vmax.f32 %v688, 0.0
        %v753 = vmax.f32 %v689, 0.0
        %v754 = vmax.f32 %v690, 0.0
        %v755 = vmax.f32 %v691, 0.0
        %v756 = vmax.f32 %v692, 0.0
        %v757 = vmax.f32 %v693, 0.0
        %v758 = vmax.f32 %v694, 0.0
        %v759 = vmax.f32 %v695, 0.0
        %v760 = vmax.f32 %v696, 0.0
        %v761 = vld [vmem:[#allocation2] sm:$0xff]
        %v762 = vld [vmem:[#allocation2 + $0x8] sm:$0xff]
        %763 = vmatprep.subr.mxu0 %v698
        %764 = vmatpush1.msra.mxu0 %v697
        %765 = vmatprep.subr.mxu0 %v700
        %766 = vmatpush1.msra.mxu0 %v699
        %767 = vmatprep.subr.mxu0 %v702
        %768 = vmatpush1.msra.mxu0 %v701
        %769 = vmatprep.subr.mxu0 %v704
        %770 = vmatpush1.msra.mxu0 %v703
        %771 = vmatprep.subr.mxu0 %v706
        %772 = vmatpush1.msra.mxu0 %v705
        %773 = vmatprep.subr.mxu0 %v708
        %774 = vmatpush1.msra.mxu0 %v707
        %775 = vmatprep.subr.mxu0 %v710
        %776 = vmatpush1.msra.mxu0 %v709
        %777 = vmatprep.subr.mxu0 %v712
        %778 = vmatpush1.msra.mxu0 %v711
        %779 = vmatprep.subr.mxu0 %v714
        %780 = vmatpush1.msra.mxu0 %v713
        %781 = vmatprep.subr.mxu0 %v716
        %782 = vmatpush1.msra.mxu0 %v715
        %783 = vmatprep.subr.mxu0 %v718
        %784 = vmatpush1.msra.mxu0 %v717
        %785 = vmatprep.subr.mxu0 %v720
        %786 = vmatpush1.msra.mxu0 %v719
        %787 = vmatprep.subr.mxu0 %v722
        %788 = vmatpush1.msra.mxu0 %v721
        %789 = vmatprep.subr.mxu0 %v724
        %790 = vmatpush1.msra.mxu0 %v723
        %791 = vmatprep.subr.mxu0 %v726
        %792 = vmatpush1.msra.mxu0 %v725
        %793 = vmatprep.subr.mxu0 %v728
        %794 = vmatpush1.msra.mxu0 %v727
        %795 = vmatprep.subr.mxu0 %v730
        %796 = vmatpush1.msra.mxu0 %v729
        %797 = vmatprep.subr.mxu0 %v732
        %798 = vmatpush1.msra.mxu0 %v731
        %799 = vmatprep.subr.mxu0 %v734
        %800 = vmatpush1.msra.mxu0 %v733
        %801 = vmatprep.subr.mxu0 %v736
        %802 = vmatpush1.msra.mxu0 %v735
        %803 = vmatprep.subr.mxu0 %v738
        %804 = vmatpush1.msra.mxu0 %v737
        %805 = vmatprep.subr.mxu0 %v740
        %806 = vmatpush1.msra.mxu0 %v739
        %807 = vmatprep.subr.mxu0 %v742
        %808 = vmatpush1.msra.mxu0 %v741
        %809 = vmatprep.subr.mxu0 %v744
        %810 = vmatpush1.msra.mxu0 %v743
        %811 = vmatprep.subr.mxu0 %v746
        %812 = vmatpush1.msra.mxu0 %v745
        %813 = vmatprep.subr.mxu0 %v748
        %814 = vmatpush1.msra.mxu0 %v747
        %815 = vmatprep.subr.mxu0 %v750
        %816 = vmatpush1.msra.mxu0 %v749
        %817 = vmatprep.subr.mxu0 %v752
        %818 = vmatpush1.msra.mxu0 %v751
        %819 = vmatprep.subr.mxu0 %v754
        %820 = vmatpush1.msra.mxu0 %v753
        %821 = vmatprep.subr.mxu0 %v756
        %822 = vmatpush1.msra.mxu0 %v755
        %823 = vmatprep.subr.mxu0 %v758
        %824 = vmatpush1.msra.mxu0 %v757
        %825 = vmatprep.subr.mxu0 %v760
        %826 = vmatpush1.msra.mxu0 %v759
        %827 = vmatprep.mubr.f32.mxu0 %v461
        %828 = vmatmul.mubr.f32.gmra.mrb[0].mxu0 %v460
        %v829 = vpop.f32.mrb[0].mxu0
        %v830 = vadd.f32 0.0, %v829
        %v831 = vpop.f32.mrb[0].mxu0
        %v832 = vadd.f32 0.0, %v831
        %833 = vdwg.mxu0
        %v834 = vadd.f32 %v761, %v830
        %v835 = vadd.f32 %v762, %v832
        %836 = vst [vmem:[#allocation2] sm:$0xff] %v834
        %837 = vst [vmem:[#allocation2 + $0x8] sm:$0xff] %v835
        // Predicated region
        $region45: #{tpu_custom_call.1} parent=39 // pred_check
          %p838 = pneg %p421
        $region46: #{tpu_custom_call.1} parent=39 // pred_check_branch
          %840 = sbr.rel (%p838) target = $region48
        $region47: #{tpu_custom_call.1} parent=39 // pred_region
          %v841 = vld [vmem:[%s3] sm:$0xf]
          %v842 = vld [vmem:[#allocation2] sm:$0xff]
          %v843 = vld [vmem:[#allocation2 + $0x8] sm:$0xff]
          %v844 = vld [vmem:[%s4] sm:$0xf]
          %846 = vset.pattern.permute.xlu0 0
          %847 = vperm.xlu0 %846, %v844
          %v848 = vpop.permute.xlu0 %847
          %vm850 = vcmask 64512
          %v852 = vsel %vm850, %v841, 0
          %854 = vmatprep.subr.mxu0 %v843
          %855 = vmatpush1.msra.mxu0 %v842
          %856 = vmatprep.subr.mxu0 0.0
          %857 = vmatpush1.msra.mxu0 0.0
          %858 = vmatprep.subr.mxu0 0.0
          %859 = vmatpush1.msra.mxu0 0.0
          %860 = vmatprep.subr.mxu0 0.0
          %861 = vmatpush1.msra.mxu0 0.0
          %862 = vmatprep.subr.mxu0 0.0
          %863 = vmatpush1.msra.mxu0 0.0
          %864 = vmatprep.subr.mxu0 0.0
          %865 = vmatpush1.msra.mxu0 0.0
          %866 = vmatprep.subr.mxu0 0.0
          %867 = vmatpush1.msra.mxu0 0.0
          %868 = vmatprep.subr.mxu0 0.0
          %869 = vmatpush1.msra.mxu0 0.0
          %870 = vmatprep.subr.mxu0 0.0
          %871 = vmatpush1.msra.mxu0 0.0
          %872 = vmatprep.subr.mxu0 0.0
          %873 = vmatpush1.msra.mxu0 0.0
          %874 = vmatprep.subr.mxu0 0.0
          %875 = vmatpush1.msra.mxu0 0.0
          %876 = vmatprep.subr.mxu0 0.0
          %877 = vmatpush1.msra.mxu0 0.0
          %878 = vmatprep.subr.mxu0 0.0
          %879 = vmatpush1.msra.mxu0 0.0
          %880 = vmatprep.subr.mxu0 0.0
          %881 = vmatpush1.msra.mxu0 0.0
          %882 = vmatprep.subr.mxu0 0.0
          %883 = vmatpush1.msra.mxu0 0.0
          %884 = vmatprep.subr.mxu0 0.0
          %885 = vmatpush1.msra.mxu0 0.0
          %886 = vmatprep.subr.mxu0 0.0
          %887 = vmatpush1.msra.mxu0 0.0
          %888 = vmatprep.subr.mxu0 0.0
          %889 = vmatpush1.msra.mxu0 0.0
          %890 = vmatprep.subr.mxu0 0.0
          %891 = vmatpush1.msra.mxu0 0.0
          %892 = vmatprep.subr.mxu0 0.0
          %893 = vmatpush1.msra.mxu0 0.0
          %894 = vmatprep.subr.mxu0 0.0
          %895 = vmatpush1.msra.mxu0 0.0
          %896 = vmatprep.subr.mxu0 0.0
          %897 = vmatpush1.msra.mxu0 0.0
          %898 = vmatprep.subr.mxu0 0.0
          %899 = vmatpush1.msra.mxu0 0.0
          %900 = vmatprep.subr.mxu0 0.0
          %901 = vmatpush1.msra.mxu0 0.0
          %902 = vmatprep.subr.mxu0 0.0
          %903 = vmatpush1.msra.mxu0 0.0
          %904 = vmatprep.subr.mxu0 0.0
          %905 = vmatpush1.msra.mxu0 0.0
          %906 = vmatprep.subr.mxu0 0.0
          %907 = vmatpush1.msra.mxu0 0.0
          %908 = vmatprep.subr.mxu0 0.0
          %909 = vmatpush1.msra.mxu0 0.0
          %910 = vmatprep.subr.mxu0 0.0
          %911 = vmatpush1.msra.mxu0 0.0
          %912 = vmatprep.subr.mxu0 0.0
          %913 = vmatpush1.msra.mxu0 0.0
          %914 = vmatprep.subr.mxu0 0.0
          %915 = vmatpush1.msra.mxu0 0.0
          %916 = vmatprep.subr.mxu0 0.0
          %917 = vmatpush1.msra.mxu0 0.0
          %918 = vmatprep.mubr.f32.mxu0 0.0
          %919 = vmatmul.mubr.f32.gmra.mrb[0].mxu0 %v852
          %v920 = vpop.f32.mrb[0].mxu0
          %v921 = vadd.f32 %v848, %v920
          %v922 = vpop.f32.mrb[0].mxu0
          %v923 = vadd.f32 %v848, %v922
          %924 = vdwg.mxu0
          %v927 = vcombine.low %v921, %v923
          %929 = vst [vmem:[%s358] sm:$0xff] %v927
          %vm930 = vcmask 1043456
          %v931 = vsel %vm930, %v921, 0.0
          %v932 = vsel %vm930, %v923, 0.0
          %v933 = vadd.f32 %v931, %v932
          %934 = vadd.xlane.f32.xlu0 %v933
          %v935 = vpop.xlane.xlu0 %934
          %vm936 = vcmask 3072
          %937 = vst.msk [vmem:[%s413] sm:$0xf] %vm936, %v935
          %v938 = vmul.f32 %v921, %v921
          %v939 = vmul.f32 %v923, %v923
          %v940 = vsel %vm930, %v938, 0.0
          %v941 = vsel %vm930, %v939, 0.0
          %v942 = vadd.f32 %v940, %v941
          %943 = vadd.xlane.f32.xlu0 %v942
          %v944 = vpop.xlane.xlu0 %943
          %945 = vst.msk [vmem:[%s420] sm:$0xf] %vm936, %v944
        $region48: #{tpu_custom_call.1} parent=39 // pred_fallthru
          _
        %s946 = sand.u32 %s177, 1
        %s947 = scalar_lea.sflag [#allocation4], %s946
        %s948 = sand.u32 %s177, 1
        %s949 = smul.addr %s948, 8
        %s950 = scalar_lea.vmem [#allocation3], %s949
        %p951 = scmp.lt.s32.totalorder %s27, 1
        %s952 = scalar_select %p951, %s27, 1
        %p953 = scmp.lt.s32.totalorder %s28, 0
        %s954 = scalar_select %p953, %s28, 0
        %s955 = sadd.s32 %s954, %s952
        %s956 = smul.addr %s955, 4
        %s957 = scalar_lea.vmem %s6, %s956
        %p958 = scmp.lt.s32.totalorder %s27, 1
        %s959 = scalar_select %p958, %s27, 1
        %p960 = scmp.lt.s32.totalorder %s28, 0
        %s961 = scalar_select %p960, %s28, 0
        %s962 = sadd.s32 %s961, %s959
        %s963 = smul.addr %s962, 4
        %s964 = scalar_lea.vmem %s7, %s963
        // Predicated region
        $region49: #{tpu_custom_call.1} parent=39 // pred_check
          %p965 = pneg %p187
        $region50: #{tpu_custom_call.1} parent=39 // pred_check_branch
          %967 = sbr.rel (%p965) target = $region52
        $region51: #{tpu_custom_call.1} parent=39 // pred_region
          %s968 = smul.u32 2, %s28
          %s970 = ssub.s32 128, 128
          %971 = vsyncadd %s947, %s970
          %s972 = smul.addr %s27, 2
          %s973 = sadd.s32 %s968, %s972
          %s974 = smul.addr %s973, 64
          %s975 = scalar_lea.hbm %s5, %s974
          %s977 = sshll.u32 %s950, 4
          %s978 = int_to_ptr.vmem [resolvable:$true] %s977
          %980 = dma.vmem_to_hbm [thread:$0]  %s978, 128, %s975, %s947
        $region52: #{tpu_custom_call.1} parent=39 // pred_fallthru
          _
        // Predicated region
        $region53: #{tpu_custom_call.1} parent=39 // pred_check
          %p981 = pneg %p215
        $region54: #{tpu_custom_call.1} parent=39 // pred_check_branch
          %983 = sbr.rel (%p981) target = $region56
        $region55: #{tpu_custom_call.1} parent=39 // pred_region
          _
        $region56: #{tpu_custom_call.1} parent=39 // pred_fallthru
          _
        // Predicated region
        $region57: #{tpu_custom_call.1} parent=39 // pred_check
          %p984 = pneg %p243
        $region58: #{tpu_custom_call.1} parent=39 // pred_check_branch
          %986 = sbr.rel (%p984) target = $region60
        $region59: #{tpu_custom_call.1} parent=39 // pred_region
          _
        $region60: #{tpu_custom_call.1} parent=39 // pred_fallthru
          _
      $region40: #{tpu_custom_call.1} parent=5 // pred_fallthru
        _
      %p987 = scmp.le.s32.totalorder 2, %s17
      // Predicated region
      $region61: #{tpu_custom_call.1} parent=5 // pred_check
        %p988 = pneg %p987
      $region62: #{tpu_custom_call.1} parent=5 // pred_check_branch
        %990 = sbr.rel (%p988) target = $region64
      $region63: #{tpu_custom_call.1} parent=5 // pred_region
        %s991 = ssub.s32 %s17, 2
        // Predicated region
        $region65: #{tpu_custom_call.1} parent=63 // pred_check
          %p992 = pneg %p193
        $region66: #{tpu_custom_call.1} parent=63 // pred_check_branch
          %994 = sbr.rel (%p992) target = $region68
        $region67: #{tpu_custom_call.1} parent=63 // pred_region
          %s995 = sand.u32 %s178, 1
          %s996 = scalar_lea.sflag [#allocation4], %s995
          %s997 = sand.u32 %s178, 1
          %s998 = smul.addr %s997, 8
          %s999 = scalar_lea.vmem [#allocation3], %s998
          %1000 = dma.done %s996, 128
        $region68: #{tpu_custom_call.1} parent=63 // pred_fallthru
          _
        // Predicated region
        $region69: #{tpu_custom_call.1} parent=63 // pred_check
          %p1001 = pneg %p221
        $region70: #{tpu_custom_call.1} parent=63 // pred_check_branch
          %1003 = sbr.rel (%p1001) target = $region72
        $region71: #{tpu_custom_call.1} parent=63 // pred_region
          %p1004 = scmp.lt.s32.totalorder %s30, 1
          %s1005 = scalar_select %p1004, %s30, 1
          %p1006 = scmp.lt.s32.totalorder %s31, 0
          %s1007 = scalar_select %p1006, %s31, 0
          %s1008 = sadd.s32 %s1007, %s1005
          %s1009 = smul.addr %s1008, 4
          %s1010 = scalar_lea.vmem %s6, %s1009
        $region72: #{tpu_custom_call.1} parent=63 // pred_fallthru
          _
        // Predicated region
        $region73: #{tpu_custom_call.1} parent=63 // pred_check
          %p1011 = pneg %p249
        $region74: #{tpu_custom_call.1} parent=63 // pred_check_branch
          %1013 = sbr.rel (%p1011) target = $region76
        $region75: #{tpu_custom_call.1} parent=63 // pred_region
          %p1014 = scmp.lt.s32.totalorder %s30, 1
          %s1015 = scalar_select %p1014, %s30, 1
          %p1016 = scmp.lt.s32.totalorder %s31, 0
          %s1017 = scalar_select %p1016, %s31, 0
          %s1018 = sadd.s32 %s1017, %s1015
          %s1019 = smul.addr %s1018, 4
          %s1020 = scalar_lea.vmem %s7, %s1019
        $region76: #{tpu_custom_call.1} parent=63 // pred_fallthru
          _
      $region64: #{tpu_custom_call.1} parent=5 // pred_fallthru
        _
    $region6: #{tpu_custom_call.1} parent=1 // loop_footer
      %s21 = sadd.s32 1, %s17
    $region7: #{tpu_custom_call.1} parent=1 // loop_footer_branch
      %16 = sbr.rel target = $region3
    $region8: #{tpu_custom_call.1} parent=1 // loop_exit
      _
    %1021 = vsyncpa [#allocation4], 1
    %s1022 = scalar_lea.sflag [#allocation4], 1
    %1023 = vsyncpa %s1022, 1

</llo_original>
